<compile_context>
chip_gen: v7x
topology: tpu7x:2x2x1
jax: 0.10.0
libtpu: 0.0.40
codegen_flags: <defaults>
</compile_context>

<pallas_src>
import jax
import jax.numpy as jnp
from jax import lax
from jax.experimental import pallas as pl
from jax.experimental.pallas import tpu as pltpu


USE_BF16_MXU = True                   # bf16-feed the F->E projection (f32 accumulation)
TILE_M = 128                          # node rows per grid step (multiple of 8)
LANE = 128                            # TPU lane width; embed dim padded to a multiple
VMEM_LIMIT_BYTES = 32 * 1024 * 1024   # fits v5e / v6e / v7x scoped-VMEM budgets


def _round_up(x, m):
    return (x + m - 1) // m * m


def _pad_last(x, target):
    pad = target - x.shape[-1]
    return x if pad == 0 else jnp.pad(x, ((0, 0), (0, pad)))


# ----------------------------- Pallas kernels ------------------------------ #

def _make_embed_kernel(type_plan, tile_m, epad, use_bf16):
    """Build the fused per-tile embedding-assembly kernel.

    type_plan: static tuple of "table" / "feat" tags, one per node type, giving
    the ordering of the parameter refs that follow (tids_ref, ids_ref).
    Out-of-range ids simply produce an all-zero one-hot row (no OOB access).
    """

    def kernel(*refs):
        tids_ref, ids_ref = refs[0], refs[1]          # [tile_m, 1] int32 each
        param_refs = refs[2:-1]
        out_ref = refs[-1]                            # [tile_m, epad] f32

        tid = tids_ref[...]
        idx = ids_ref[...]
        acc = jnp.zeros((tile_m, epad), jnp.float32)

        r = 0
        for ntype, kind in enumerate(type_plan):
            sel = tid == ntype                        # fuse the per-type mask
            if kind == "table":
                table = param_refs[r][...]            # [V, epad] f32
                r += 1
                rows = table.shape[0]
                onehot = ((lax.broadcasted_iota(jnp.int32, (tile_m, rows), 1) == idx)
                          & sel).astype(jnp.float32)
                # exact row gather via MXU one-hot matmul
                acc = acc + jnp.dot(onehot, table,
                                    preferred_element_type=jnp.float32)
            else:
                feats = param_refs[r][...]            # [R, F]   f32
                w = param_refs[r + 1][...]            # [F, epad] f32
                r += 2
                rows = feats.shape[0]
                onehot = ((lax.broadcasted_iota(jnp.int32, (tile_m, rows), 1) == idx)
                          & sel).astype(jnp.float32)
                x = jnp.dot(onehot, feats,            # exact gathered feature rows
                            preferred_element_type=jnp.float32)
                if use_bf16:                          # bf16-feed the MXU, f32 accum
                    x = x.astype(jnp.bfloat16)
                    w = w.astype(jnp.bfloat16)
                acc = acc + jnp.dot(x, w, preferred_element_type=jnp.float32)

        out_ref[...] = acc                            # single lane-dense store

    return kernel


def u_mul_v_kernel(src_ref, dst_ref, hu_ref, hv_ref, out_ref):
    """DotProductPredictor body: w_new[e] = h[src[e]] * h[dst[e]] (elementwise)."""
    del src_ref, dst_ref                              # only used by the index_maps
    out_ref[...] = hu_ref[...] * hv_ref[...]


# ----------------------------- kernel wrappers ------------------------------ #

def rel_graph_embed_forward(node_tids, type_ids, features, params, embed_size,
                            tile_m=TILE_M, use_bf16=USE_BF16_MXU):
    """h[i] = per-type embedding/projection of node i (input layer of BaseRGCN)."""
    n = node_tids.shape[0]
    epad = _round_up(embed_size, LANE)
    tile_m = min(tile_m, _round_up(n, 8))
    npad = _round_up(n, tile_m)

    # pad the node axis; padded rows get tid = -1 -> no type matches -> zeros
    tids = jnp.full((npad, 1), -1, jnp.int32).at[:n, 0].set(node_tids.astype(jnp.int32))
    ids = jnp.zeros((npad, 1), jnp.int32).at[:n, 0].set(type_ids.astype(jnp.int32))

    operands = [tids, ids]
    in_specs = [pl.BlockSpec((tile_m, 1), lambda i: (i, 0)),
                pl.BlockSpec((tile_m, 1), lambda i: (i, 0))]
    type_plan = []
    for ntype, feat in enumerate(features):
        if isinstance(feat, int):
            table = _pad_last(params["node_embeds"][str(ntype)], epad)
            operands.append(table)
            in_specs.append(pl.BlockSpec(table.shape, lambda i: (0, 0)))
            type_plan.append("table")
        else:
            w = _pad_last(params["embeds"][str(ntype)], epad)
            operands.append(feat)
            in_specs.append(pl.BlockSpec(feat.shape, lambda i: (0, 0)))
            operands.append(w)
            in_specs.append(pl.BlockSpec(w.shape, lambda i: (0, 0)))
            type_plan.append("feat")

    grid = (npad // tile_m,)
    out = pl.pallas_call(
        _make_embed_kernel(tuple(type_plan), tile_m, epad, use_bf16),
        out_shape=jax.ShapeDtypeStruct((npad, epad), jnp.float32),
        grid_spec=pltpu.PrefetchScalarGridSpec(
            num_scalar_prefetch=0,
            grid=grid,
            in_specs=in_specs,
            out_specs=pl.BlockSpec((tile_m, epad), lambda i: (i, 0)),
        ),
        compiler_params=pltpu.CompilerParams(
            dimension_semantics=("parallel",),
            vmem_limit_bytes=VMEM_LIMIT_BYTES),
    )(*operands)
    return out[:n, :embed_size]


def dot_product_predictor(h, src, dst):
    """w_new[e] = h[src[e]] * h[dst[e]]; gathers driven by scalar-prefetched ids."""
    num_edges = src.shape[0]
    n, e = h.shape
    epad = _round_up(e, LANE)
    # [N, 1, epad] so each 1-row gather block equals the full last-two dims
    h3 = _pad_last(h, epad).reshape(n, 1, epad)

    out = pl.pallas_call(
        u_mul_v_kernel,
        out_shape=jax.ShapeDtypeStruct((num_edges, 1, epad), jnp.float32),
        grid_spec=pltpu.PrefetchScalarGridSpec(
            num_scalar_prefetch=2,                     # src, dst ids -> SMEM
            grid=(num_edges,),
            in_specs=[
                pl.BlockSpec((1, 1, epad), lambda ei, s, d: (s[ei], 0, 0)),
                pl.BlockSpec((1, 1, epad), lambda ei, s, d: (d[ei], 0, 0)),
            ],
            out_specs=pl.BlockSpec((1, 1, epad), lambda ei, s, d: (ei, 0, 0)),
        ),
        compiler_params=pltpu.CompilerParams(
            dimension_semantics=("arbitrary",),
            vmem_limit_bytes=VMEM_LIMIT_BYTES),
    )(src.astype(jnp.int32), dst.astype(jnp.int32), h3, h3)
    return out.reshape(num_edges, epad)[:, :e]


# ----------------------------- module equivalent ---------------------------- #

def init_rel_graph_embed_params(key, features, embed_size):
    """Parameter init mirroring the RGCN input layer (embedding tables / W)."""
    params = {"node_embeds": {}, "embeds": {}}
    for ntype, inp in enumerate(features):
        key, sub = jax.random.split(key)
        if isinstance(inp, int):
            # nn.Embedding(inp, embed_size) with uniform_(-1, 1)
            params["node_embeds"][str(ntype)] = jax.random.uniform(
                sub, (inp, embed_size), jnp.float32, minval=-1.0, maxval=1.0)
        else:
            # nn.Parameter([feat_dim, embed_size]) with xavier_uniform_
            feat_dim = inp.shape[1]
            bound = (6.0 / (feat_dim + embed_size)) ** 0.5
            params["embeds"][str(ntype)] = jax.random.uniform(
                sub, (feat_dim, embed_size), jnp.float32,
                minval=-bound, maxval=bound)
    return params


def base_rgcn_forward(src, dst, node_tids, type_ids, features, params, embed_size):
    """BaseRGCN.forward: input embedding layer -> (hidden layers) -> u_mul_v edges."""
    # g.ndata['id'] = arange(N) is implicit (type_ids are the per-type row ids).
    h = rel_graph_embed_forward(node_tids, type_ids, features, params, embed_size)
    # TODO(synk): BaseRGCN.build_hidden_layer()/build_output_layer() are abstract
    # (raise NotImplementedError) in the spec, so no hidden RelGraphConv layers run.
    w_new = dot_product_predictor(h, src, dst)
    return w_new, h


# ------------------------------ pure-JAX reference -------------------------- #

def rel_graph_embed_reference(node_tids, type_ids, features, params, embed_size):
    n = node_tids.shape[0]
    out = jnp.zeros((n, embed_size), jnp.float32)
    for ntype, feat in enumerate(features):
        if isinstance(feat, int):
            table = params["node_embeds"][str(ntype)]
            branch = table[jnp.clip(type_ids, 0, table.shape[0] - 1)]
        else:
            w = params["embeds"][str(ntype)]
            branch = feat[jnp.clip(type_ids, 0, feat.shape[0] - 1)] @ w
        out = jnp.where((node_tids == ntype)[:, None], branch, out)
    return out


# ----------------------------------- main ----------------------------------- #

if __name__ == "__main__":
    key = jax.random.PRNGKey(0)

    # Small, deterministic config.
    num_ntypes = 2
    embed_size = 32           # padded to 128 lanes inside the kernels
    n_nodes = 512             # 4 row tiles of TILE_M=128
    num_edges = 256
    ntype0_vocab = 10         # ntype 0: featureless -> embedding table [10, 32]
    ntype1_rows = 12          # ntype 1: dense features [12, 24] projected by W [24, 32]
    ntype1_featdim = 24

    key, kf, kt, ki, ks, kd = jax.random.split(key, 6)
    features = [
        ntype0_vocab,
        jax.random.normal(kf, (ntype1_rows, ntype1_featdim), jnp.float32),
    ]
    params = init_rel_graph_embed_params(key, features, embed_size)

    node_tids = jax.random.randint(kt, (n_nodes,), 0, num_ntypes, jnp.int32)
    raw_ids = jax.random.randint(ki, (n_nodes,), 0, 1 << 20, jnp.int32)
    type_ids = jnp.where(node_tids == 0,
                         raw_ids % ntype0_vocab,
                         raw_ids % ntype1_rows).astype(jnp.int32)
    src = jax.random.randint(ks, (num_edges,), 0, n_nodes, jnp.int32)
    dst = jax.random.randint(kd, (num_edges,), 0, n_nodes, jnp.int32)

    w_new, h = base_rgcn_forward(src, dst, node_tids, type_ids, features,
                                 params, embed_size)
    w_new = jax.block_until_ready(w_new)
    h = jax.block_until_ready(h)
    assert h.shape == (n_nodes, embed_size)
    assert w_new.shape == (num_edges, embed_size)

    # --- correctness checks ---
    h_ref = rel_graph_embed_reference(node_tids, type_ids, features, params,
                                      embed_size)
    # 1) the embedding-table path (type 0) is an exact gather
    mask0 = (node_tids == 0)[:, None]
    assert jnp.allclose(jnp.where(mask0, h, 0.0), jnp.where(mask0, h_ref, 0.0),
                        atol=1e-5, rtol=1e-5), "type-0 gather mismatch"
    # 2) full h vs f32 reference (loose tolerance: the F->E projection feeds the
    #    MXU with bf16; error bound << 5e-2 for these magnitudes)
    assert jnp.allclose(h, h_ref, atol=5e-2, rtol=5e-2), "embedding mismatch"
    # 3) the edge predictor kernel is exact w.r.t. the h it consumed
    assert jnp.allclose(w_new, h[src] * h[dst], atol=1e-6, rtol=1e-6), \
        "u_mul_v mismatch"
    # 4) end-to-end vs pure-f32 reference
    assert jnp.allclose(w_new, h_ref[src] * h_ref[dst], atol=1e-1, rtol=1e-1), \
        "end-to-end mismatch"

    print("KERNEL_OK")
</pallas_src>

<mosaic_0001>
module attributes {stable_mosaic.version = 11 : i64} {
  func.func @kernel(%arg0: i32, %arg1: memref<128x1xi32, #tpu.memory_space<vmem>>, %arg2: memref<128x1xi32, #tpu.memory_space<vmem>>, %arg3: memref<10x128xf32, #tpu.memory_space<vmem>>, %arg4: memref<12x24xf32, #tpu.memory_space<vmem>>, %arg5: memref<24x128xf32, #tpu.memory_space<vmem>>, %arg6: memref<128x128xf32, #tpu.memory_space<vmem>>) attributes {dimension_semantics = [#tpu.dimension_semantics<parallel>], iteration_bounds = array<i64: 4>, scalar_prefetch = 0 : i64, scratch_operands = 0 : i64, tpu.core_type = #tpu.core_type<tc>, window_params = [{transform_indices = @transform_0, window_bounds = array<i64: 128, 1>}, {transform_indices = @transform_1, window_bounds = array<i64: 128, 1>}, {pipeline_mode = #tpu.pipeline_mode<synchronous>, transform_indices = @transform_2, window_bounds = array<i64: 10, 128>}, {pipeline_mode = #tpu.pipeline_mode<synchronous>, transform_indices = @transform_3, window_bounds = array<i64: 12, 24>}, {pipeline_mode = #tpu.pipeline_mode<synchronous>, transform_indices = @transform_4, window_bounds = array<i64: 24, 128>}, {transform_indices = @transform_5, window_bounds = array<i64: 128, 128>}]} {
    %c0 = arith.constant 0 : index
    %c0_0 = arith.constant 0 : index
    %0 = vector.load %arg1[%c0, %c0_0] : memref<128x1xi32, #tpu.memory_space<vmem>>, vector<128x1xi32>
    %c0_1 = arith.constant 0 : index
    %c0_2 = arith.constant 0 : index
    %1 = vector.load %arg2[%c0_1, %c0_2] : memref<128x1xi32, #tpu.memory_space<vmem>>, vector<128x1xi32>
    %cst = arith.constant 0.000000e+00 : f32
    %2 = vector.broadcast %cst : f32 to vector<128x128xf32>
    %c0_i32 = arith.constant 0 : i32
    %3 = vector.broadcast %c0_i32 : i32 to vector<128x1xi32>
    %4 = arith.cmpi eq, %0, %3 : vector<128x1xi32>
    %c0_3 = arith.constant 0 : index
    %c0_4 = arith.constant 0 : index
    %5 = vector.load %arg3[%c0_3, %c0_4] : memref<10x128xf32, #tpu.memory_space<vmem>>, vector<10x128xf32>
    %6 = tpu.iota {dimensions = array<i32: 1>} : vector<128x10xi32>
    %7 = vector.broadcast %1 : vector<128x1xi32> to vector<128x10xi32>
    %8 = arith.cmpi eq, %6, %7 : vector<128x10xi32>
    %9 = vector.broadcast %4 : vector<128x1xi1> to vector<128x10xi1>
    %10 = arith.andi %8, %9 : vector<128x10xi1>
    %11 = arith.extui %10 : vector<128x10xi1> to vector<128x10xi32>
    %12 = arith.sitofp %11 : vector<128x10xi32> to vector<128x10xf32>
    %cst_5 = arith.constant dense<0.000000e+00> : vector<128x128xf32>
    %13 = tpu.matmul %12, %5, %cst_5 {dimension_numbers = #tpu.dot_dimension_numbers<[1], [0], [0], [1], [0, 0, 1, 1], [], []>} : vector<128x10xf32>, vector<10x128xf32>, vector<128x128xf32> -> vector<128x128xf32>
    %14 = arith.addf %2, %13 : vector<128x128xf32>
    %c1_i32 = arith.constant 1 : i32
    %15 = vector.broadcast %c1_i32 : i32 to vector<128x1xi32>
    %16 = arith.cmpi eq, %0, %15 : vector<128x1xi32>
    %c0_6 = arith.constant 0 : index
    %c0_7 = arith.constant 0 : index
    %17 = vector.load %arg4[%c0_6, %c0_7] : memref<12x24xf32, #tpu.memory_space<vmem>>, vector<12x24xf32>
    %c0_8 = arith.constant 0 : index
    %c0_9 = arith.constant 0 : index
    %18 = vector.load %arg5[%c0_8, %c0_9] : memref<24x128xf32, #tpu.memory_space<vmem>>, vector<24x128xf32>
    %19 = tpu.iota {dimensions = array<i32: 1>} : vector<128x12xi32>
    %20 = vector.broadcast %1 : vector<128x1xi32> to vector<128x12xi32>
    %21 = arith.cmpi eq, %19, %20 : vector<128x12xi32>
    %22 = vector.broadcast %16 : vector<128x1xi1> to vector<128x12xi1>
    %23 = arith.andi %21, %22 : vector<128x12xi1>
    %24 = arith.extui %23 : vector<128x12xi1> to vector<128x12xi32>
    %25 = arith.sitofp %24 : vector<128x12xi32> to vector<128x12xf32>
    %cst_10 = arith.constant dense<0.000000e+00> : vector<128x24xf32>
    %26 = tpu.matmul %25, %17, %cst_10 {dimension_numbers = #tpu.dot_dimension_numbers<[1], [0], [0], [1], [0, 0, 1, 1], [], []>} : vector<128x12xf32>, vector<12x24xf32>, vector<128x24xf32> -> vector<128x24xf32>
    %27 = arith.truncf %26 : vector<128x24xf32> to vector<128x24xbf16>
    %28 = arith.truncf %18 : vector<24x128xf32> to vector<24x128xbf16>
    %cst_11 = arith.constant dense<0.000000e+00> : vector<128x128xf32>
    %29 = tpu.matmul %27, %28, %cst_11 {dimension_numbers = #tpu.dot_dimension_numbers<[1], [0], [0], [1], [0, 0, 1, 1], [], []>} : vector<128x24xbf16>, vector<24x128xbf16>, vector<128x128xf32> -> vector<128x128xf32>
    %30 = arith.addf %14, %29 : vector<128x128xf32>
    %c0_12 = arith.constant 0 : index
    %c0_13 = arith.constant 0 : index
    %31 = vector.load %arg6[%c0_12, %c0_13] : memref<128x128xf32, #tpu.memory_space<vmem>>, vector<128x128xf32>
    tpu.vector_store %arg6[%c0_12, %c0_13], %30 {strides = array<i32>} : memref<128x128xf32, #tpu.memory_space<vmem>>, vector<128x128xf32>,
    return
  }
  func.func @transform_0(%arg0: i32) -> (i32, i32) {
    %c0_i32 = arith.constant 0 : i32
    %c0_i32_0 = arith.constant 0 : i32
    return %arg0, %c0_i32 : i32, i32
  }
  func.func @transform_1(%arg0: i32) -> (i32, i32) {
    %c0_i32 = arith.constant 0 : i32
    %c0_i32_0 = arith.constant 0 : i32
    return %arg0, %c0_i32 : i32, i32
  }
  func.func @transform_2(%arg0: i32) -> (i32, i32) {
    %c0_i32 = arith.constant 0 : i32
    %c0_i32_0 = arith.constant 0 : i32
    %c0_i32_1 = arith.constant 0 : i32
    return %c0_i32, %c0_i32_0 : i32, i32
  }
  func.func @transform_3(%arg0: i32) -> (i32, i32) {
    %c0_i32 = arith.constant 0 : i32
    %c0_i32_0 = arith.constant 0 : i32
    %c0_i32_1 = arith.constant 0 : i32
    return %c0_i32, %c0_i32_0 : i32, i32
  }
  func.func @transform_4(%arg0: i32) -> (i32, i32) {
    %c0_i32 = arith.constant 0 : i32
    %c0_i32_0 = arith.constant 0 : i32
    %c0_i32_1 = arith.constant 0 : i32
    return %c0_i32, %c0_i32_0 : i32, i32
  }
  func.func @transform_5(%arg0: i32) -> (i32, i32) {
    %c0_i32 = arith.constant 0 : i32
    %c0_i32_0 = arith.constant 0 : i32
    return %arg0, %c0_i32 : i32, i32
  }
}

</mosaic_0001>

<llo_original>
// kernel: tpu_custom_call.1
$region0: #{tpu_custom_call.1}
  #allocation0 [shape = 'u32[]', space=smem, size = 0x4, offset = 0x4, fixed_abs, tag = 'smem constant byte address 0x4 - core index']
  #allocation1 [shape = 'u32[144,128]{1,0:T(1,128)}', space=vmem, size = 0x12000, scoped, tag = 'internal scratch']
  %s0 = inlined_call_operand.vmem [shape: s32[512,1], index: 0, kind: input, shape index: {}]
  %s1 = inlined_call_operand.vmem [shape: s32[512,1], index: 1, kind: input, shape index: {}]
  %s2 = inlined_call_operand.vmem [shape: f32[10,128], index: 2, kind: input, shape index: {}]
  %s3 = inlined_call_operand.vmem [shape: f32[12,24], index: 3, kind: input, shape index: {}]
  %s4 = inlined_call_operand.vmem [shape: f32[24,128], index: 4, kind: input, shape index: {}]
  %s5 = inlined_call_operand.hbm [shape: f32[512,128], index: 5, kind: output, shape index: {}]
  %s6 = sld [smem:[#allocation0]]
  $region53: #{tpu_custom_call.1} parent=0
    _
  %s8 = ssub.s32 1, %s6
  %s9 = scalar_select 0, %s8, %s6
  $region1: #{tpu_custom_call.1} parent=0
    #allocation2 [shape = 'u8[131072]{0}', space=vmem, size = 0x20000, scoped, tag = 'output window, operand 0']
    #allocation3 [shape = 's32[2]{0}', space=sflag, size = 0x8, scoped, tag = 'scoped memory for tpu_custom_call.1']
    %10 = vsyncpa [#allocation3], 0
    %s11 = scalar_lea.sflag [#allocation3], 1
    %12 = vsyncpa %s11, 0
    loop: start=0, step=1, limit=6
    $region2: #{tpu_custom_call.1} parent=1 // loop_pre_header
      _
    $region3: #{tpu_custom_call.1} parent=1 // loop_header
      %s14 = sphi 0, %s18
      %p15 = scmp.ge.s32.totalorder %s14, 6
      %s24 = sphi 0, %s26
      %s27 = sphi 0, %s24
      %s28 = sphi 0, %s27
      %s44 = sphi 0, %s28
      %s50 = sphi 0, %s52
      %s53 = sphi 0, %s50
      %s54 = sphi 0, %s53
      %s70 = sphi 0, %s54
      %s74 = sphi 0, %s74
      %s76 = sphi 0, %s74
      %s77 = sphi 0, %s76
      %s91 = sphi 0, %s77
      %s95 = sphi 0, %s95
      %s97 = sphi 0, %s95
      %s98 = sphi 0, %s97
      %s112 = sphi 0, %s98
      %s116 = sphi 0, %s116
      %s118 = sphi 0, %s116
      %s119 = sphi 0, %s118
      %s133 = sphi 0, %s119
      %s139 = sphi 0, %s141
      %s142 = sphi 0, %s139
      %s143 = sphi 0, %s142
      %s159 = sphi 0, %s143
    $region4: #{tpu_custom_call.1} parent=1 // loop_header_branch
      %17 = sbr.rel (%p15) target = $region8
    $region5: #{tpu_custom_call.1} parent=1 // loop_body
      %s19 = ssub.s32 %s14, 1
      %s20 = ssub.s32 %s14, 2
      %s21 = sadd.s32 %s14, 1
      %s22 = ssub.s32 %s14, %s21
      %p23 = scmp.eq.s32.totalorder %s22, 0
      %s25 = sadd.s32 %s24, 1
      %s26 = scalar_select %p23, %s24, %s25
      %p29 = pneg %p23
      %p30 = scmp.eq.s32.totalorder %s14, 3
      %p31 = por %p29, %p30
      %p32 = scmp.ne.s32.totalorder %s24, %s27
      %p33 = scmp.eq.s32.totalorder %s14, 0
      %p34 = por %p32, %p33
      %p35 = scmp.ne.s32.totalorder %s24, %s27
      %p36 = scmp.eq.s32.totalorder %s19, 3
      %p37 = por %p35, %p36
      %p38 = scmp.ne.s32.totalorder %s27, %s28
      %p39 = scmp.eq.s32.totalorder %s19, 0
      %p40 = por %p38, %p39
      %p41 = scmp.ne.s32.totalorder %s27, %s28
      %p42 = scmp.eq.s32.totalorder %s20, 3
      %p43 = por %p41, %p42
      %p45 = scmp.ne.s32.totalorder %s28, %s44
      %p46 = scmp.eq.s32.totalorder %s20, 0
      %p47 = por %p45, %p46
      %s48 = ssub.s32 %s14, %s21
      %p49 = scmp.eq.s32.totalorder %s48, 0
      %s51 = sadd.s32 %s50, 1
      %s52 = scalar_select %p49, %s50, %s51
      %p55 = pneg %p49
      %p56 = scmp.eq.s32.totalorder %s14, 3
      %p57 = por %p55, %p56
      %p58 = scmp.ne.s32.totalorder %s50, %s53
      %p59 = scmp.eq.s32.totalorder %s14, 0
      %p60 = por %p58, %p59
      %p61 = scmp.ne.s32.totalorder %s50, %s53
      %p62 = scmp.eq.s32.totalorder %s19, 3
      %p63 = por %p61, %p62
      %p64 = scmp.ne.s32.totalorder %s53, %s54
      %p65 = scmp.eq.s32.totalorder %s19, 0
      %p66 = por %p64, %p65
      %p67 = scmp.ne.s32.totalorder %s53, %s54
      %p68 = scmp.eq.s32.totalorder %s20, 3
      %p69 = por %p67, %p68
      %p71 = scmp.ne.s32.totalorder %s54, %s70
      %p72 = scmp.eq.s32.totalorder %s20, 0
      %p73 = por %p71, %p72
      %s75 = sadd.s32 %s74, 1
      %p78 = scmp.eq.s32.totalorder %s14, 3
      %p79 = scmp.ne.s32.totalorder %s74, %s76
      %p80 = scmp.eq.s32.totalorder %s14, 0
      %p81 = por %p79, %p80
      %p82 = scmp.ne.s32.totalorder %s74, %s76
      %p83 = scmp.eq.s32.totalorder %s19, 3
      %p84 = por %p82, %p83
      %p85 = scmp.ne.s32.totalorder %s76, %s77
      %p86 = scmp.eq.s32.totalorder %s19, 0
      %p87 = por %p85, %p86
      %p88 = scmp.ne.s32.totalorder %s76, %s77
      %p89 = scmp.eq.s32.totalorder %s20, 3
      %p90 = por %p88, %p89
      %p92 = scmp.ne.s32.totalorder %s77, %s91
      %p93 = scmp.eq.s32.totalorder %s20, 0
      %p94 = por %p92, %p93
      %s96 = sadd.s32 %s95, 1
      %p99 = scmp.eq.s32.totalorder %s14, 3
      %p100 = scmp.ne.s32.totalorder %s95, %s97
      %p101 = scmp.eq.s32.totalorder %s14, 0
      %p102 = por %p100, %p101
      %p103 = scmp.ne.s32.totalorder %s95, %s97
      %p104 = scmp.eq.s32.totalorder %s19, 3
      %p105 = por %p103, %p104
      %p106 = scmp.ne.s32.totalorder %s97, %s98
      %p107 = scmp.eq.s32.totalorder %s19, 0
      %p108 = por %p106, %p107
      %p109 = scmp.ne.s32.totalorder %s97, %s98
      %p110 = scmp.eq.s32.totalorder %s20, 3
      %p111 = por %p109, %p110
      %p113 = scmp.ne.s32.totalorder %s98, %s112
      %p114 = scmp.eq.s32.totalorder %s20, 0
      %p115 = por %p113, %p114
      %s117 = sadd.s32 %s116, 1
      %p120 = scmp.eq.s32.totalorder %s14, 3
      %p121 = scmp.ne.s32.totalorder %s116, %s118
      %p122 = scmp.eq.s32.totalorder %s14, 0
      %p123 = por %p121, %p122
      %p124 = scmp.ne.s32.totalorder %s116, %s118
      %p125 = scmp.eq.s32.totalorder %s19, 3
      %p126 = por %p124, %p125
      %p127 = scmp.ne.s32.totalorder %s118, %s119
      %p128 = scmp.eq.s32.totalorder %s19, 0
      %p129 = por %p127, %p128
      %p130 = scmp.ne.s32.totalorder %s118, %s119
      %p131 = scmp.eq.s32.totalorder %s20, 3
      %p132 = por %p130, %p131
      %p134 = scmp.ne.s32.totalorder %s119, %s133
      %p135 = scmp.eq.s32.totalorder %s20, 0
      %p136 = por %p134, %p135
      %s137 = ssub.s32 %s14, %s21
      %p138 = scmp.eq.s32.totalorder %s137, 0
      %s140 = sadd.s32 %s139, 1
      %s141 = scalar_select %p138, %s139, %s140
      %p144 = pneg %p138
      %p145 = scmp.eq.s32.totalorder %s14, 3
      %p146 = por %p144, %p145
      %p147 = scmp.ne.s32.totalorder %s139, %s142
      %p148 = scmp.eq.s32.totalorder %s14, 0
      %p149 = por %p147, %p148
      %p150 = scmp.ne.s32.totalorder %s139, %s142
      %p151 = scmp.eq.s32.totalorder %s19, 3
      %p152 = por %p150, %p151
      %p153 = scmp.ne.s32.totalorder %s142, %s143
      %p154 = scmp.eq.s32.totalorder %s19, 0
      %p155 = por %p153, %p154
      %p156 = scmp.ne.s32.totalorder %s142, %s143
      %p157 = scmp.eq.s32.totalorder %s20, 3
      %p158 = por %p156, %p157
      %p160 = scmp.ne.s32.totalorder %s143, %s159
      %p161 = scmp.eq.s32.totalorder %s20, 0
      %p162 = por %p160, %p161
      %p163 = scmp.le.s32.totalorder 1, %s14
      %p164 = scmp.lt.s32.totalorder %s14, 5
      %p165 = pnand %p163, %p164
      %p166 = pneg %p165
      // Predicated region
      $region9: #{tpu_custom_call.1} parent=5 // pred_check
        _
      $region10: #{tpu_custom_call.1} parent=5 // pred_check_branch
        %168 = sbr.rel (%p165) target = $region12
      $region11: #{tpu_custom_call.1} parent=5 // pred_region
        %s169 = ssub.s32 %s14, 1
        // Predicated region
        $region13: #{tpu_custom_call.1} parent=11 // pred_check
          %p170 = pneg %p87
        $region14: #{tpu_custom_call.1} parent=11 // pred_check_branch
          %172 = sbr.rel (%p170) target = $region16
        $region15: #{tpu_custom_call.1} parent=11 // pred_region
          _
        $region16: #{tpu_custom_call.1} parent=11 // pred_fallthru
          _
        // Predicated region
        $region17: #{tpu_custom_call.1} parent=11 // pred_check
          %p173 = pneg %p108
        $region18: #{tpu_custom_call.1} parent=11 // pred_check_branch
          %175 = sbr.rel (%p173) target = $region20
        $region19: #{tpu_custom_call.1} parent=11 // pred_region
          _
        $region20: #{tpu_custom_call.1} parent=11 // pred_fallthru
          _
        // Predicated region
        $region21: #{tpu_custom_call.1} parent=11 // pred_check
          %p176 = pneg %p129
        $region22: #{tpu_custom_call.1} parent=11 // pred_check_branch
          %178 = sbr.rel (%p176) target = $region24
        $region23: #{tpu_custom_call.1} parent=11 // pred_region
          _
        $region24: #{tpu_custom_call.1} parent=11 // pred_fallthru
          _
      $region12: #{tpu_custom_call.1} parent=5 // pred_fallthru
        _
      %p179 = scmp.lt.s32.totalorder %s14, 4
      // Predicated region
      $region25: #{tpu_custom_call.1} parent=5 // pred_check
        %p180 = pneg %p179
      $region26: #{tpu_custom_call.1} parent=5 // pred_check_branch
        %182 = sbr.rel (%p180) target = $region28
      $region27: #{tpu_custom_call.1} parent=5 // pred_region
        // Predicated region
        $region29: #{tpu_custom_call.1} parent=27 // pred_check
          %p183 = pneg %p34
        $region30: #{tpu_custom_call.1} parent=27 // pred_check_branch
          %185 = sbr.rel (%p183) target = $region32
        $region31: #{tpu_custom_call.1} parent=27 // pred_region
          %s186 = smul.u32 16, %s14
          %p187 = scmp.lt.s32.totalorder %s186, 63
          %s188 = scalar_select %p187, %s186, 63
          %s189 = smul.addr %s188, 8
          %s190 = scalar_lea.vmem %s0, %s189
          %s191 = smul.u32 16, %s14
        $region32: #{tpu_custom_call.1} parent=27 // pred_fallthru
          _
        // Predicated region
        $region33: #{tpu_custom_call.1} parent=27 // pred_check
          %p192 = pneg %p60
        $region34: #{tpu_custom_call.1} parent=27 // pred_check_branch
          %194 = sbr.rel (%p192) target = $region36
        $region35: #{tpu_custom_call.1} parent=27 // pred_region
          %s195 = smul.u32 16, %s14
          %p196 = scmp.lt.s32.totalorder %s195, 63
          %s197 = scalar_select %p196, %s195, 63
          %s198 = smul.addr %s197, 8
          %s199 = scalar_lea.vmem %s1, %s198
          %s200 = smul.u32 16, %s14
        $region36: #{tpu_custom_call.1} parent=27 // pred_fallthru
          _
      $region28: #{tpu_custom_call.1} parent=5 // pred_fallthru
        _
      %p201 = scmp.le.s32.totalorder 1, %s14
      %p202 = scmp.lt.s32.totalorder %s14, 5
      %p203 = pnand %p201, %p202
      %p204 = pneg %p203
      // Predicated region
      $region37: #{tpu_custom_call.1} parent=5 // pred_check
        _
      $region38: #{tpu_custom_call.1} parent=5 // pred_check_branch
        %206 = sbr.rel (%p203) target = $region40
      $region39: #{tpu_custom_call.1} parent=5 // pred_region
        %s207 = ssub.s32 %s14, 1
        %s208 = smul.u32 16, %s19
        %p209 = scmp.lt.s32.totalorder %s208, 63
        %s210 = scalar_select %p209, %s208, 63
        %s211 = smul.addr %s210, 8
        %s212 = scalar_lea.vmem %s0, %s211
        %p213 = pneg %p40
        %p214 = pneg %p37
        %s215 = smul.u32 16, %s19
        %p216 = scmp.lt.s32.totalorder %s215, 63
        %s217 = scalar_select %p216, %s215, 63
        %s218 = smul.addr %s217, 8
        %s219 = scalar_lea.vmem %s1, %s218
        %p220 = pneg %p66
        %p221 = pneg %p63
        %p222 = pneg %p87
        %p223 = pneg %p84
        %p224 = pneg %p108
        %p225 = pneg %p105
        %p226 = pneg %p129
        %p227 = pneg %p126
        %p228 = pneg %p155
        %p229 = pneg %p152
        %s230 = sand.u32 %s142, 1
        %s231 = scalar_lea.sflag [#allocation3], %s230
        %s232 = sand.u32 %s142, 1
        %s233 = smul.addr %s232, 128
        %s234 = scalar_lea.vmem [#allocation2], %s233
        %s235 = smul.u32 16, %s19
        %p236 = scmp.lt.s32.totalorder %s235, 63
        %s237 = scalar_select %p236, %s235, 63
        %s238 = smul.addr %s237, 8
        %s239 = scalar_lea.vmem %s0, %s238
        %s240 = smul.u32 16, %s19
        %s241 = smul.u32 16, %s19
        %p242 = scmp.lt.s32.totalorder %s241, 63
        %s243 = scalar_select %p242, %s241, 63
        %s244 = smul.addr %s243, 8
        %s245 = scalar_lea.vmem %s1, %s244
        %s246 = smul.u32 16, %s19
        %s247 = smul.u32 16, %s19
        %v249 = vld [vmem:[%s239] sm:$0xff]
        %v250 = vld [vmem:[%s239 + $0x8] sm:$0xff]
        %v251 = vld [vmem:[%s239 + $0x10] sm:$0xff]
        %v252 = vld [vmem:[%s239 + $0x18] sm:$0xff]
        %v253 = vld [vmem:[%s239 + $0x20] sm:$0xff]
        %v254 = vld [vmem:[%s239 + $0x28] sm:$0xff]
        %v255 = vld [vmem:[%s239 + $0x30] sm:$0xff]
        %v256 = vld [vmem:[%s239 + $0x38] sm:$0xff]
        %v257 = vld [vmem:[%s239 + $0x40] sm:$0xff]
        %v258 = vld [vmem:[%s239 + $0x48] sm:$0xff]
        %v259 = vld [vmem:[%s239 + $0x50] sm:$0xff]
        %v260 = vld [vmem:[%s239 + $0x58] sm:$0xff]
        %v261 = vld [vmem:[%s239 + $0x60] sm:$0xff]
        %v262 = vld [vmem:[%s239 + $0x68] sm:$0xff]
        %v263 = vld [vmem:[%s239 + $0x70] sm:$0xff]
        %v264 = vld [vmem:[%s239 + $0x78] sm:$0xff]
        %v265 = vld [vmem:[%s245] sm:$0xff]
        %v266 = vld [vmem:[%s245 + $0x8] sm:$0xff]
        %v267 = vld [vmem:[%s245 + $0x10] sm:$0xff]
        %v268 = vld [vmem:[%s245 + $0x18] sm:$0xff]
        %v269 = vld [vmem:[%s245 + $0x20] sm:$0xff]
        %v270 = vld [vmem:[%s245 + $0x28] sm:$0xff]
        %v271 = vld [vmem:[%s245 + $0x30] sm:$0xff]
        %v272 = vld [vmem:[%s245 + $0x38] sm:$0xff]
        %v273 = vld [vmem:[%s245 + $0x40] sm:$0xff]
        %v274 = vld [vmem:[%s245 + $0x48] sm:$0xff]
        %v275 = vld [vmem:[%s245 + $0x50] sm:$0xff]
        %v276 = vld [vmem:[%s245 + $0x58] sm:$0xff]
        %v277 = vld [vmem:[%s245 + $0x60] sm:$0xff]
        %v278 = vld [vmem:[%s245 + $0x68] sm:$0xff]
        %v279 = vld [vmem:[%s245 + $0x70] sm:$0xff]
        %v280 = vld [vmem:[%s245 + $0x78] sm:$0xff]
        %vm281 = vcmp.eq.s32.totalorder %v249, 0
        %vm282 = vcmp.eq.s32.totalorder %v250, 0
        %vm283 = vcmp.eq.s32.totalorder %v251, 0
        %vm284 = vcmp.eq.s32.totalorder %v252, 0
        %vm285 = vcmp.eq.s32.totalorder %v253, 0
        %vm286 = vcmp.eq.s32.totalorder %v254, 0
        %vm287 = vcmp.eq.s32.totalorder %v255, 0
        %vm288 = vcmp.eq.s32.totalorder %v256, 0
        %vm289 = vcmp.eq.s32.totalorder %v257, 0
        %vm290 = vcmp.eq.s32.totalorder %v258, 0
        %vm291 = vcmp.eq.s32.totalorder %v259, 0
        %vm292 = vcmp.eq.s32.totalorder %v260, 0
        %vm293 = vcmp.eq.s32.totalorder %v261, 0
        %vm294 = vcmp.eq.s32.totalorder %v262, 0
        %vm295 = vcmp.eq.s32.totalorder %v263, 0
        %vm296 = vcmp.eq.s32.totalorder %v264, 0
        %v297 = vld [vmem:[%s2] sm:$0xff]
        %v298 = vld [vmem:[%s2 + $0x8] sm:$0x3]
        %v299 = vlaneseq
        %v300 = vand.u32 %v299, 127
        %301 = vset.pattern.permute.xlu0 0
        %302 = vperm.xlu0 %301, %v265
        %v303 = vpop.permute.xlu0 %302
        %304 = vset.pattern.permute.xlu0 0
        %305 = vperm.xlu0 %304, %v266
        %v306 = vpop.permute.xlu0 %305
        %307 = vset.pattern.permute.xlu0 0
        %308 = vperm.xlu0 %307, %v267
        %v309 = vpop.permute.xlu0 %308
        %310 = vset.pattern.permute.xlu0 0
        %311 = vperm.xlu0 %310, %v268
        %v312 = vpop.permute.xlu0 %311
        %313 = vset.pattern.permute.xlu0 0
        %314 = vperm.xlu0 %313, %v269
        %v315 = vpop.permute.xlu0 %314
        %316 = vset.pattern.permute.xlu0 0
        %317 = vperm.xlu0 %316, %v270
        %v318 = vpop.permute.xlu0 %317
        %319 = vset.pattern.permute.xlu0 0
        %320 = vperm.xlu0 %319, %v271
        %v321 = vpop.permute.xlu0 %320
        %322 = vset.pattern.permute.xlu0 0
        %323 = vperm.xlu0 %322, %v272
        %v324 = vpop.permute.xlu0 %323
        %325 = vset.pattern.permute.xlu0 0
        %326 = vperm.xlu0 %325, %v273
        %v327 = vpop.permute.xlu0 %326
        %328 = vset.pattern.permute.xlu0 0
        %329 = vperm.xlu0 %328, %v274
        %v330 = vpop.permute.xlu0 %329
        %331 = vset.pattern.permute.xlu0 0
        %332 = vperm.xlu0 %331, %v275
        %v333 = vpop.permute.xlu0 %332
        %334 = vset.pattern.permute.xlu0 0
        %335 = vperm.xlu0 %334, %v276
        %v336 = vpop.permute.xlu0 %335
        %337 = vset.pattern.permute.xlu0 0
        %338 = vperm.xlu0 %337, %v277
        %v339 = vpop.permute.xlu0 %338
        %340 = vset.pattern.permute.xlu0 0
        %341 = vperm.xlu0 %340, %v278
        %v342 = vpop.permute.xlu0 %341
        %343 = vset.pattern.permute.xlu0 0
        %344 = vperm.xlu0 %343, %v279
        %v345 = vpop.permute.xlu0 %344
        %346 = vset.pattern.permute.xlu0 0
        %347 = vperm.xlu0 %346, %v280
        %v348 = vpop.permute.xlu0 %347
        %vm349 = vcmp.eq.s32.totalorder %v300, %v303
        %vm350 = vcmp.eq.s32.totalorder %v300, %v306
        %vm351 = vcmp.eq.s32.totalorder %v300, %v309
        %vm352 = vcmp.eq.s32.totalorder %v300, %v312
        %vm353 = vcmp.eq.s32.totalorder %v300, %v315
        %vm354 = vcmp.eq.s32.totalorder %v300, %v318
        %vm355 = vcmp.eq.s32.totalorder %v300, %v321
        %vm356 = vcmp.eq.s32.totalorder %v300, %v324
        %vm357 = vcmp.eq.s32.totalorder %v300, %v327
        %vm358 = vcmp.eq.s32.totalorder %v300, %v330
        %vm359 = vcmp.eq.s32.totalorder %v300, %v333
        %vm360 = vcmp.eq.s32.totalorder %v300, %v336
        %vm361 = vcmp.eq.s32.totalorder %v300, %v339
        %vm362 = vcmp.eq.s32.totalorder %v300, %v342
        %vm363 = vcmp.eq.s32.totalorder %v300, %v345
        %vm364 = vcmp.eq.s32.totalorder %v300, %v348
        %v365 = vsel %vm281, 1, 0
        %v366 = vsel %vm282, 1, 0
        %v367 = vsel %vm283, 1, 0
        %v368 = vsel %vm284, 1, 0
        %v369 = vsel %vm285, 1, 0
        %v370 = vsel %vm286, 1, 0
        %v371 = vsel %vm287, 1, 0
        %v372 = vsel %vm288, 1, 0
        %v373 = vsel %vm289, 1, 0
        %v374 = vsel %vm290, 1, 0
        %v375 = vsel %vm291, 1, 0
        %v376 = vsel %vm292, 1, 0
        %v377 = vsel %vm293, 1, 0
        %v378 = vsel %vm294, 1, 0
        %v379 = vsel %vm295, 1, 0
        %v380 = vsel %vm296, 1, 0
        %381 = vset.pattern.permute.xlu0 0
        %382 = vperm.xlu0 %381, %v365
        %v383 = vpop.permute.xlu0 %382
        %384 = vset.pattern.permute.xlu0 0
        %385 = vperm.xlu0 %384, %v366
        %v386 = vpop.permute.xlu0 %385
        %387 = vset.pattern.permute.xlu0 0
        %388 = vperm.xlu0 %387, %v367
        %v389 = vpop.permute.xlu0 %388
        %390 = vset.pattern.permute.xlu0 0
        %391 = vperm.xlu0 %390, %v368
        %v392 = vpop.permute.xlu0 %391
        %393 = vset.pattern.permute.xlu0 0
        %394 = vperm.xlu0 %393, %v369
        %v395 = vpop.permute.xlu0 %394
        %396 = vset.pattern.permute.xlu0 0
        %397 = vperm.xlu0 %396, %v370
        %v398 = vpop.permute.xlu0 %397
        %399 = vset.pattern.permute.xlu0 0
        %400 = vperm.xlu0 %399, %v371
        %v401 = vpop.permute.xlu0 %400
        %402 = vset.pattern.permute.xlu0 0
        %403 = vperm.xlu0 %402, %v372
        %v404 = vpop.permute.xlu0 %403
        %405 = vset.pattern.permute.xlu0 0
        %406 = vperm.xlu0 %405, %v373
        %v407 = vpop.permute.xlu0 %406
        %408 = vset.pattern.permute.xlu0 0
        %409 = vperm.xlu0 %408, %v374
        %v410 = vpop.permute.xlu0 %409
        %411 = vset.pattern.permute.xlu0 0
        %412 = vperm.xlu0 %411, %v375
        %v413 = vpop.permute.xlu0 %412
        %414 = vset.pattern.permute.xlu0 0
        %415 = vperm.xlu0 %414, %v376
        %v416 = vpop.permute.xlu0 %415
        %417 = vset.pattern.permute.xlu0 0
        %418 = vperm.xlu0 %417, %v377
        %v419 = vpop.permute.xlu0 %418
        %420 = vset.pattern.permute.xlu0 0
        %421 = vperm.xlu0 %420, %v378
        %v422 = vpop.permute.xlu0 %421
        %423 = vset.pattern.permute.xlu0 0
        %424 = vperm.xlu0 %423, %v379
        %v425 = vpop.permute.xlu0 %424
        %426 = vset.pattern.permute.xlu0 0
        %427 = vperm.xlu0 %426, %v380
        %v428 = vpop.permute.xlu0 %427
        %vm429 = vcmp.eq.s32.totalorder %v383, 1
        %vm430 = vcmp.eq.s32.totalorder %v386, 1
        %vm431 = vcmp.eq.s32.totalorder %v389, 1
        %vm432 = vcmp.eq.s32.totalorder %v392, 1
        %vm433 = vcmp.eq.s32.totalorder %v395, 1
        %vm434 = vcmp.eq.s32.totalorder %v398, 1
        %vm435 = vcmp.eq.s32.totalorder %v401, 1
        %vm436 = vcmp.eq.s32.totalorder %v404, 1
        %vm437 = vcmp.eq.s32.totalorder %v407, 1
        %vm438 = vcmp.eq.s32.totalorder %v410, 1
        %vm439 = vcmp.eq.s32.totalorder %v413, 1
        %vm440 = vcmp.eq.s32.totalorder %v416, 1
        %vm441 = vcmp.eq.s32.totalorder %v419, 1
        %vm442 = vcmp.eq.s32.totalorder %v422, 1
        %vm443 = vcmp.eq.s32.totalorder %v425, 1
        %vm444 = vcmp.eq.s32.totalorder %v428, 1
        %vm445 = vmand %vm349, %vm429
        %vm446 = vmand %vm350, %vm430
        %vm447 = vmand %vm351, %vm431
        %vm448 = vmand %vm352, %vm432
        %vm449 = vmand %vm353, %vm433
        %vm450 = vmand %vm354, %vm434
        %vm451 = vmand %vm355, %vm435
        %vm452 = vmand %vm356, %vm436
        %vm453 = vmand %vm357, %vm437
        %vm454 = vmand %vm358, %vm438
        %vm455 = vmand %vm359, %vm439
        %vm456 = vmand %vm360, %vm440
        %vm457 = vmand %vm361, %vm441
        %vm458 = vmand %vm362, %vm442
        %vm459 = vmand %vm363, %vm443
        %vm460 = vmand %vm364, %vm444
        %v461 = vsel %vm445, 1, 0
        %v462 = vsel %vm446, 1, 0
        %v463 = vsel %vm447, 1, 0
        %v464 = vsel %vm448, 1, 0
        %v465 = vsel %vm449, 1, 0
        %v466 = vsel %vm450, 1, 0
        %v467 = vsel %vm451, 1, 0
        %v468 = vsel %vm452, 1, 0
        %v469 = vsel %vm453, 1, 0
        %v470 = vsel %vm454, 1, 0
        %v471 = vsel %vm455, 1, 0
        %v472 = vsel %vm456, 1, 0
        %v473 = vsel %vm457, 1, 0
        %v474 = vsel %vm458, 1, 0
        %v475 = vsel %vm459, 1, 0
        %v476 = vsel %vm460, 1, 0
        %v477 = vcvt.s32.f32 %v461
        %v478 = vcvt.s32.f32 %v462
        %v479 = vcvt.s32.f32 %v463
        %v480 = vcvt.s32.f32 %v464
        %v481 = vcvt.s32.f32 %v465
        %v482 = vcvt.s32.f32 %v466
        %v483 = vcvt.s32.f32 %v467
        %v484 = vcvt.s32.f32 %v468
        %v485 = vcvt.s32.f32 %v469
        %v486 = vcvt.s32.f32 %v470
        %v487 = vcvt.s32.f32 %v471
        %v488 = vcvt.s32.f32 %v472
        %v489 = vcvt.s32.f32 %v473
        %v490 = vcvt.s32.f32 %v474
        %v491 = vcvt.s32.f32 %v475
        %v492 = vcvt.s32.f32 %v476
        %vm493 = vcmp.eq.s32.totalorder %v249, 1
        %vm494 = vcmp.eq.s32.totalorder %v250, 1
        %vm495 = vcmp.eq.s32.totalorder %v251, 1
        %vm496 = vcmp.eq.s32.totalorder %v252, 1
        %vm497 = vcmp.eq.s32.totalorder %v253, 1
        %vm498 = vcmp.eq.s32.totalorder %v254, 1
        %vm499 = vcmp.eq.s32.totalorder %v255, 1
        %vm500 = vcmp.eq.s32.totalorder %v256, 1
        %vm501 = vcmp.eq.s32.totalorder %v257, 1
        %vm502 = vcmp.eq.s32.totalorder %v258, 1
        %vm503 = vcmp.eq.s32.totalorder %v259, 1
        %vm504 = vcmp.eq.s32.totalorder %v260, 1
        %vm505 = vcmp.eq.s32.totalorder %v261, 1
        %vm506 = vcmp.eq.s32.totalorder %v262, 1
        %vm507 = vcmp.eq.s32.totalorder %v263, 1
        %vm508 = vcmp.eq.s32.totalorder %v264, 1
        %v509 = vld [vmem:[%s3] sm:$0xff]
        %v510 = vld [vmem:[%s3 + $0x8] sm:$0xf]
        %v511 = vld [vmem:[%s4] sm:$0xff]
        %v512 = vld [vmem:[%s4 + $0x8] sm:$0xff]
        %v513 = vld [vmem:[%s4 + $0x10] sm:$0xff]
        %v514 = vsel %vm493, 1, 0
        %v515 = vsel %vm494, 1, 0
        %v516 = vsel %vm495, 1, 0
        %v517 = vsel %vm496, 1, 0
        %v518 = vsel %vm497, 1, 0
        %v519 = vsel %vm498, 1, 0
        %v520 = vsel %vm499, 1, 0
        %v521 = vsel %vm500, 1, 0
        %v522 = vsel %vm501, 1, 0
        %v523 = vsel %vm502, 1, 0
        %v524 = vsel %vm503, 1, 0
        %v525 = vsel %vm504, 1, 0
        %v526 = vsel %vm505, 1, 0
        %v527 = vsel %vm506, 1, 0
        %v528 = vsel %vm507, 1, 0
        %v529 = vsel %vm508, 1, 0
        %530 = vset.pattern.permute.xlu0 0
        %531 = vperm.xlu0 %530, %v514
        %v532 = vpop.permute.xlu0 %531
        %533 = vset.pattern.permute.xlu0 0
        %534 = vperm.xlu0 %533, %v515
        %v535 = vpop.permute.xlu0 %534
        %536 = vset.pattern.permute.xlu0 0
        %537 = vperm.xlu0 %536, %v516
        %v538 = vpop.permute.xlu0 %537
        %539 = vset.pattern.permute.xlu0 0
        %540 = vperm.xlu0 %539, %v517
        %v541 = vpop.permute.xlu0 %540
        %542 = vset.pattern.permute.xlu0 0
        %543 = vperm.xlu0 %542, %v518
        %v544 = vpop.permute.xlu0 %543
        %545 = vset.pattern.permute.xlu0 0
        %546 = vperm.xlu0 %545, %v519
        %v547 = vpop.permute.xlu0 %546
        %548 = vset.pattern.permute.xlu0 0
        %549 = vperm.xlu0 %548, %v520
        %v550 = vpop.permute.xlu0 %549
        %551 = vset.pattern.permute.xlu0 0
        %552 = vperm.xlu0 %551, %v521
        %v553 = vpop.permute.xlu0 %552
        %554 = vset.pattern.permute.xlu0 0
        %555 = vperm.xlu0 %554, %v522
        %v556 = vpop.permute.xlu0 %555
        %557 = vset.pattern.permute.xlu0 0
        %558 = vperm.xlu0 %557, %v523
        %v559 = vpop.permute.xlu0 %558
        %560 = vset.pattern.permute.xlu0 0
        %561 = vperm.xlu0 %560, %v524
        %v562 = vpop.permute.xlu0 %561
        %563 = vset.pattern.permute.xlu0 0
        %564 = vperm.xlu0 %563, %v525
        %v565 = vpop.permute.xlu0 %564
        %566 = vset.pattern.permute.xlu0 0
        %567 = vperm.xlu0 %566, %v526
        %v568 = vpop.permute.xlu0 %567
        %569 = vset.pattern.permute.xlu0 0
        %570 = vperm.xlu0 %569, %v527
        %v571 = vpop.permute.xlu0 %570
        %572 = vset.pattern.permute.xlu0 0
        %573 = vperm.xlu0 %572, %v528
        %v574 = vpop.permute.xlu0 %573
        %575 = vset.pattern.permute.xlu0 0
        %576 = vperm.xlu0 %575, %v529
        %v577 = vpop.permute.xlu0 %576
        %vm578 = vcmp.eq.s32.totalorder %v532, 1
        %vm579 = vcmp.eq.s32.totalorder %v535, 1
        %vm580 = vcmp.eq.s32.totalorder %v538, 1
        %vm581 = vcmp.eq.s32.totalorder %v541, 1
        %vm582 = vcmp.eq.s32.totalorder %v544, 1
        %vm583 = vcmp.eq.s32.totalorder %v547, 1
        %vm584 = vcmp.eq.s32.totalorder %v550, 1
        %vm585 = vcmp.eq.s32.totalorder %v553, 1
        %vm586 = vcmp.eq.s32.totalorder %v556, 1
        %vm587 = vcmp.eq.s32.totalorder %v559, 1
        %vm588 = vcmp.eq.s32.totalorder %v562, 1
        %vm589 = vcmp.eq.s32.totalorder %v565, 1
        %vm590 = vcmp.eq.s32.totalorder %v568, 1
        %vm591 = vcmp.eq.s32.totalorder %v571, 1
        %vm592 = vcmp.eq.s32.totalorder %v574, 1
        %vm593 = vcmp.eq.s32.totalorder %v577, 1
        %vm594 = vmand %vm349, %vm578
        %vm595 = vmand %vm350, %vm579
        %vm596 = vmand %vm351, %vm580
        %vm597 = vmand %vm352, %vm581
        %vm598 = vmand %vm353, %vm582
        %vm599 = vmand %vm354, %vm583
        %vm600 = vmand %vm355, %vm584
        %vm601 = vmand %vm356, %vm585
        %vm602 = vmand %vm357, %vm586
        %vm603 = vmand %vm358, %vm587
        %vm604 = vmand %vm359, %vm588
        %vm605 = vmand %vm360, %vm589
        %vm606 = vmand %vm361, %vm590
        %vm607 = vmand %vm362, %vm591
        %vm608 = vmand %vm363, %vm592
        %vm609 = vmand %vm364, %vm593
        %v610 = vsel %vm594, 1, 0
        %v611 = vsel %vm595, 1, 0
        %v612 = vsel %vm596, 1, 0
        %v613 = vsel %vm597, 1, 0
        %v614 = vsel %vm598, 1, 0
        %v615 = vsel %vm599, 1, 0
        %v616 = vsel %vm600, 1, 0
        %v617 = vsel %vm601, 1, 0
        %v618 = vsel %vm602, 1, 0
        %v619 = vsel %vm603, 1, 0
        %v620 = vsel %vm604, 1, 0
        %v621 = vsel %vm605, 1, 0
        %v622 = vsel %vm606, 1, 0
        %v623 = vsel %vm607, 1, 0
        %v624 = vsel %vm608, 1, 0
        %v625 = vsel %vm609, 1, 0
        %v626 = vcvt.s32.f32 %v610
        %v627 = vcvt.s32.f32 %v611
        %v628 = vcvt.s32.f32 %v612
        %v629 = vcvt.s32.f32 %v613
        %v630 = vcvt.s32.f32 %v614
        %v631 = vcvt.s32.f32 %v615
        %v632 = vcvt.s32.f32 %v616
        %v633 = vcvt.s32.f32 %v617
        %v634 = vcvt.s32.f32 %v618
        %v635 = vcvt.s32.f32 %v619
        %v636 = vcvt.s32.f32 %v620
        %v637 = vcvt.s32.f32 %v621
        %v638 = vcvt.s32.f32 %v622
        %v639 = vcvt.s32.f32 %v623
        %v640 = vcvt.s32.f32 %v624
        %v641 = vcvt.s32.f32 %v625
        %vm642 = vcmask 97280
        %v644 = vsel %vm642, %v626, 0
        %v647 = vsel %vm642, %v627, 0
        %v650 = vsel %vm642, %v628, 0
        %v653 = vsel %vm642, %v629, 0
        %v656 = vsel %vm642, %v630, 0
        %v659 = vsel %vm642, %v631, 0
        %v662 = vsel %vm642, %v632, 0
        %v665 = vsel %vm642, %v633, 0
        %v668 = vsel %vm642, %v634, 0
        %v671 = vsel %vm642, %v635, 0
        %v674 = vsel %vm642, %v636, 0
        %v677 = vsel %vm642, %v637, 0
        %v680 = vsel %vm642, %v638, 0
        %v683 = vsel %vm642, %v639, 0
        %v686 = vsel %vm642, %v640, 0
        %v689 = vsel %vm642, %v641, 0
        %vm691 = vcmask 1043456
        %v693 = vsel %vm691, %v510, 0
        %695 = vmatprep.subr.mxu0 0.0
        %696 = vmatpush1.msra.mxu0 %v509
        %697 = vmatprep.subr.mxu0 0.0
        %698 = vmatpush1.msra.mxu0 %v693
        %699 = vmatprep.subr.mxu0 0.0
        %700 = vmatpush1.msra.mxu0 0.0
        %701 = vmatprep.subr.mxu0 0.0
        %702 = vmatpush1.msra.mxu0 0.0
        %703 = vmatprep.subr.mxu0 0.0
        %704 = vmatpush1.msra.mxu0 0.0
        %705 = vmatprep.subr.mxu0 0.0
        %706 = vmatpush1.msra.mxu0 0.0
        %707 = vmatprep.subr.mxu0 0.0
        %708 = vmatpush1.msra.mxu0 0.0
        %709 = vmatprep.subr.mxu0 0.0
        %710 = vmatpush1.msra.mxu0 0.0
        %711 = vmatprep.subr.mxu0 0.0
        %712 = vmatpush1.msra.mxu0 0.0
        %713 = vmatprep.subr.mxu0 0.0
        %714 = vmatpush1.msra.mxu0 0.0
        %715 = vmatprep.subr.mxu0 0.0
        %716 = vmatpush1.msra.mxu0 0.0
        %717 = vmatprep.subr.mxu0 0.0
        %718 = vmatpush1.msra.mxu0 0.0
        %719 = vmatprep.subr.mxu0 0.0
        %720 = vmatpush1.msra.mxu0 0.0
        %721 = vmatprep.subr.mxu0 0.0
        %722 = vmatpush1.msra.mxu0 0.0
        %723 = vmatprep.subr.mxu0 0.0
        %724 = vmatpush1.msra.mxu0 0.0
        %725 = vmatprep.subr.mxu0 0.0
        %726 = vmatpush1.msra.mxu0 0.0
        %727 = vmatprep.subr.mxu0 0.0
        %728 = vmatpush1.msra.mxu0 0.0
        %729 = vmatprep.subr.mxu0 0.0
        %730 = vmatpush1.msra.mxu0 0.0
        %731 = vmatprep.subr.mxu0 0.0
        %732 = vmatpush1.msra.mxu0 0.0
        %733 = vmatprep.subr.mxu0 0.0
        %734 = vmatpush1.msra.mxu0 0.0
        %735 = vmatprep.subr.mxu0 0.0
        %736 = vmatpush1.msra.mxu0 0.0
        %737 = vmatprep.subr.mxu0 0.0
        %738 = vmatpush1.msra.mxu0 0.0
        %739 = vmatprep.subr.mxu0 0.0
        %740 = vmatpush1.msra.mxu0 0.0
        %741 = vmatprep.subr.mxu0 0.0
        %742 = vmatpush1.msra.mxu0 0.0
        %743 = vmatprep.subr.mxu0 0.0
        %744 = vmatpush1.msra.mxu0 0.0
        %745 = vmatprep.subr.mxu0 0.0
        %746 = vmatpush1.msra.mxu0 0.0
        %747 = vmatprep.subr.mxu0 0.0
        %748 = vmatpush1.msra.mxu0 0.0
        %749 = vmatprep.subr.mxu0 0.0
        %750 = vmatpush1.msra.mxu0 0.0
        %751 = vmatprep.subr.mxu0 0.0
        %752 = vmatpush1.msra.mxu0 0.0
        %753 = vmatprep.subr.mxu0 0.0
        %754 = vmatpush1.msra.mxu0 0.0
        %755 = vmatprep.subr.mxu0 0.0
        %756 = vmatpush1.msra.mxu0 0.0
        %757 = vmatprep.subr.mxu0 0.0
        %758 = vmatpush1.msra.mxu0 0.0
        %759 = vmatprep.mubr.f32.mxu0 0.0
        %760 = vmatmul.mubr.f32.gmra.mrb[0].mxu0 %v644
        %v761 = vpop.f32.mrb[0].mxu0
        %v762 = vadd.f32 0.0, %v761
        %v763 = vpop.f32.mrb[0].mxu0
        %764 = vmatprep.mubr.f32.mxu0 0.0
        %765 = vmatmul.mubr.f32.gmra.mrb[0].mxu0 %v647
        %v766 = vpop.f32.mrb[0].mxu0
        %v767 = vadd.f32 0.0, %v766
        %v768 = vpop.f32.mrb[0].mxu0
        %769 = vmatprep.mubr.f32.mxu0 0.0
        %770 = vmatmul.mubr.f32.gmra.mrb[0].mxu0 %v650
        %v771 = vpop.f32.mrb[0].mxu0
        %v772 = vadd.f32 0.0, %v771
        %v773 = vpop.f32.mrb[0].mxu0
        %774 = vmatprep.mubr.f32.mxu0 0.0
        %775 = vmatmul.mubr.f32.gmra.mrb[0].mxu0 %v653
        %v776 = vpop.f32.mrb[0].mxu0
        %v777 = vadd.f32 0.0, %v776
        %v778 = vpop.f32.mrb[0].mxu0
        %779 = vmatprep.mubr.f32.mxu0 0.0
        %780 = vmatmul.mubr.f32.gmra.mrb[0].mxu0 %v656
        %v781 = vpop.f32.mrb[0].mxu0
        %v782 = vadd.f32 0.0, %v781
        %v783 = vpop.f32.mrb[0].mxu0
        %784 = vmatprep.mubr.f32.mxu0 0.0
        %785 = vmatmul.mubr.f32.gmra.mrb[0].mxu0 %v659
        %v786 = vpop.f32.mrb[0].mxu0
        %v787 = vadd.f32 0.0, %v786
        %v788 = vpop.f32.mrb[0].mxu0
        %789 = vmatprep.mubr.f32.mxu0 0.0
        %790 = vmatmul.mubr.f32.gmra.mrb[0].mxu0 %v662
        %v791 = vpop.f32.mrb[0].mxu0
        %v792 = vadd.f32 0.0, %v791
        %v793 = vpop.f32.mrb[0].mxu0
        %794 = vmatprep.mubr.f32.mxu0 0.0
        %795 = vmatmul.mubr.f32.gmra.mrb[0].mxu0 %v665
        %v796 = vpop.f32.mrb[0].mxu0
        %v797 = vadd.f32 0.0, %v796
        %v798 = vpop.f32.mrb[0].mxu0
        %799 = vmatprep.mubr.f32.mxu0 0.0
        %800 = vmatmul.mubr.f32.gmra.mrb[0].mxu0 %v668
        %v801 = vpop.f32.mrb[0].mxu0
        %v802 = vadd.f32 0.0, %v801
        %v803 = vpop.f32.mrb[0].mxu0
        %804 = vmatprep.mubr.f32.mxu0 0.0
        %805 = vmatmul.mubr.f32.gmra.mrb[0].mxu0 %v671
        %v806 = vpop.f32.mrb[0].mxu0
        %v807 = vadd.f32 0.0, %v806
        %v808 = vpop.f32.mrb[0].mxu0
        %809 = vmatprep.mubr.f32.mxu0 0.0
        %810 = vmatmul.mubr.f32.gmra.mrb[0].mxu0 %v674
        %v811 = vpop.f32.mrb[0].mxu0
        %v812 = vadd.f32 0.0, %v811
        %v813 = vpop.f32.mrb[0].mxu0
        %814 = vmatprep.mubr.f32.mxu0 0.0
        %815 = vmatmul.mubr.f32.gmra.mrb[0].mxu0 %v677
        %v816 = vpop.f32.mrb[0].mxu0
        %v817 = vadd.f32 0.0, %v816
        %v818 = vpop.f32.mrb[0].mxu0
        %819 = vmatprep.mubr.f32.mxu0 0.0
        %820 = vmatmul.mubr.f32.gmra.mrb[0].mxu0 %v680
        %v821 = vpop.f32.mrb[0].mxu0
        %v822 = vadd.f32 0.0, %v821
        %v823 = vpop.f32.mrb[0].mxu0
        %824 = vmatprep.mubr.f32.mxu0 0.0
        %825 = vmatmul.mubr.f32.gmra.mrb[0].mxu0 %v683
        %v826 = vpop.f32.mrb[0].mxu0
        %v827 = vadd.f32 0.0, %v826
        %v828 = vpop.f32.mrb[0].mxu0
        %829 = vmatprep.mubr.f32.mxu0 0.0
        %830 = vmatmul.mubr.f32.gmra.mrb[0].mxu0 %v686
        %v831 = vpop.f32.mrb[0].mxu0
        %v832 = vadd.f32 0.0, %v831
        %v833 = vpop.f32.mrb[0].mxu0
        %834 = vmatprep.mubr.f32.mxu0 0.0
        %835 = vmatmul.mubr.f32.gmra.mrb[0].mxu0 %v689
        %v836 = vpop.f32.mrb[0].mxu0
        %v837 = vadd.f32 0.0, %v836
        %v838 = vpop.f32.mrb[0].mxu0
        %839 = vdwg.mxu0
        %v840 = vpack.c.bf16 %v767, %v762
        %v841 = vpack.c.bf16 %v777, %v772
        %v842 = vpack.c.bf16 %v787, %v782
        %v843 = vpack.c.bf16 %v797, %v792
        %v844 = vpack.c.bf16 %v807, %v802
        %v845 = vpack.c.bf16 %v817, %v812
        %v846 = vpack.c.bf16 %v827, %v822
        %v847 = vpack.c.bf16 %v837, %v832
        %v848 = vpack.c.bf16 %v512, %v511
        %v849 = vpack.c.bf16 %v513, %v513
        %vm850 = vcmask 195584
        %v852 = vsel %vm850, %v840, 0
        %v855 = vsel %vm850, %v841, 0
        %v858 = vsel %vm850, %v842, 0
        %v861 = vsel %vm850, %v843, 0
        %v864 = vsel %vm850, %v844, 0
        %v867 = vsel %vm850, %v845, 0
        %v870 = vsel %vm850, %v846, 0
        %v873 = vsel %vm850, %v847, 0
        %v876 = vsel %vm691, %v849, 0
        %878 = vmatprep.subr.bf16.mxu0 0
        %879 = vmatpush1.bf16.msra.mxu0 %v848
        %880 = vmatprep.subr.bf16.mxu0 0
        %881 = vmatpush1.bf16.msra.mxu0 %v876
        %882 = vmatprep.subr.bf16.mxu0 0
        %883 = vmatpush1.bf16.msra.mxu0 0
        %884 = vmatprep.subr.bf16.mxu0 0
        %885 = vmatpush1.bf16.msra.mxu0 0
        %886 = vmatprep.subr.bf16.mxu0 0
        %887 = vmatpush1.bf16.msra.mxu0 0
        %888 = vmatprep.subr.bf16.mxu0 0
        %889 = vmatpush1.bf16.msra.mxu0 0
        %890 = vmatprep.subr.bf16.mxu0 0
        %891 = vmatpush1.bf16.msra.mxu0 0
        %892 = vmatprep.subr.bf16.mxu0 0
        %893 = vmatpush1.bf16.msra.mxu0 0
        %894 = vmatprep.subr.bf16.mxu0 0
        %895 = vmatpush1.bf16.msra.mxu0 0
        %896 = vmatprep.subr.bf16.mxu0 0
        %897 = vmatpush1.bf16.msra.mxu0 0
        %898 = vmatprep.subr.bf16.mxu0 0
        %899 = vmatpush1.bf16.msra.mxu0 0
        %900 = vmatprep.subr.bf16.mxu0 0
        %901 = vmatpush1.bf16.msra.mxu0 0
        %902 = vmatprep.subr.bf16.mxu0 0
        %903 = vmatpush1.bf16.msra.mxu0 0
        %904 = vmatprep.subr.bf16.mxu0 0
        %905 = vmatpush1.bf16.msra.mxu0 0
        %906 = vmatprep.subr.bf16.mxu0 0
        %907 = vmatpush1.bf16.msra.mxu0 0
        %908 = vmatprep.subr.bf16.mxu0 0
        %909 = vmatpush1.bf16.msra.mxu0 0
        %910 = vmatprep.mubr.bf16.mxu0 0
        %911 = vmatmul.mubr.bf16.gmra.mrb[0].mxu0 %v852
        %v912 = vpop.f32.mrb[0].mxu0
        %v913 = vadd.f32 0.0, %v912
        %v914 = vpop.f32.mrb[0].mxu0
        %v915 = vpop.f32.mrb[0].mxu0
        %v916 = vadd.f32 0.0, %v915
        %v917 = vpop.f32.mrb[0].mxu0
        %918 = vmatprep.mubr.bf16.mxu0 0
        %919 = vmatmul.mubr.bf16.gmra.mrb[0].mxu0 %v855
        %v920 = vpop.f32.mrb[0].mxu0
        %v921 = vadd.f32 0.0, %v920
        %v922 = vpop.f32.mrb[0].mxu0
        %v923 = vpop.f32.mrb[0].mxu0
        %v924 = vadd.f32 0.0, %v923
        %v925 = vpop.f32.mrb[0].mxu0
        %926 = vmatprep.mubr.bf16.mxu0 0
        %927 = vmatmul.mubr.bf16.gmra.mrb[0].mxu0 %v858
        %v928 = vpop.f32.mrb[0].mxu0
        %v929 = vadd.f32 0.0, %v928
        %v930 = vpop.f32.mrb[0].mxu0
        %v931 = vpop.f32.mrb[0].mxu0
        %v932 = vadd.f32 0.0, %v931
        %v933 = vpop.f32.mrb[0].mxu0
        %934 = vmatprep.mubr.bf16.mxu0 0
        %935 = vmatmul.mubr.bf16.gmra.mrb[0].mxu0 %v861
        %v936 = vpop.f32.mrb[0].mxu0
        %v937 = vadd.f32 0.0, %v936
        %v938 = vpop.f32.mrb[0].mxu0
        %v939 = vpop.f32.mrb[0].mxu0
        %v940 = vadd.f32 0.0, %v939
        %v941 = vpop.f32.mrb[0].mxu0
        %942 = vmatprep.mubr.bf16.mxu0 0
        %943 = vmatmul.mubr.bf16.gmra.mrb[0].mxu0 %v864
        %v944 = vpop.f32.mrb[0].mxu0
        %v945 = vadd.f32 0.0, %v944
        %v946 = vpop.f32.mrb[0].mxu0
        %v947 = vpop.f32.mrb[0].mxu0
        %v948 = vadd.f32 0.0, %v947
        %v949 = vpop.f32.mrb[0].mxu0
        %950 = vmatprep.mubr.bf16.mxu0 0
        %951 = vmatmul.mubr.bf16.gmra.mrb[0].mxu0 %v867
        %v952 = vpop.f32.mrb[0].mxu0
        %v953 = vadd.f32 0.0, %v952
        %v954 = vpop.f32.mrb[0].mxu0
        %v955 = vpop.f32.mrb[0].mxu0
        %v956 = vadd.f32 0.0, %v955
        %v957 = vpop.f32.mrb[0].mxu0
        %958 = vmatprep.mubr.bf16.mxu0 0
        %959 = vmatmul.mubr.bf16.gmra.mrb[0].mxu0 %v870
        %v960 = vpop.f32.mrb[0].mxu0
        %v961 = vadd.f32 0.0, %v960
        %v962 = vpop.f32.mrb[0].mxu0
        %v963 = vpop.f32.mrb[0].mxu0
        %v964 = vadd.f32 0.0, %v963
        %v965 = vpop.f32.mrb[0].mxu0
        %966 = vmatprep.mubr.bf16.mxu0 0
        %967 = vmatmul.mubr.bf16.gmra.mrb[0].mxu0 %v873
        %v968 = vpop.f32.mrb[0].mxu0
        %v969 = vadd.f32 0.0, %v968
        %v970 = vpop.f32.mrb[0].mxu0
        %v971 = vpop.f32.mrb[0].mxu0
        %v972 = vadd.f32 0.0, %v971
        %v973 = vpop.f32.mrb[0].mxu0
        %974 = vdwg.mxu0
        %vm975 = vcmask 80896
        %v977 = vsel %vm975, %v477, 0
        %v980 = vsel %vm975, %v478, 0
        %v983 = vsel %vm975, %v479, 0
        %v986 = vsel %vm975, %v480, 0
        %v989 = vsel %vm975, %v481, 0
        %v992 = vsel %vm975, %v482, 0
        %v995 = vsel %vm975, %v483, 0
        %v998 = vsel %vm975, %v484, 0
        %v1001 = vsel %vm975, %v485, 0
        %v1004 = vsel %vm975, %v486, 0
        %v1007 = vsel %vm975, %v487, 0
        %v1010 = vsel %vm975, %v488, 0
        %v1013 = vsel %vm975, %v489, 0
        %v1016 = vsel %vm975, %v490, 0
        %v1019 = vsel %vm975, %v491, 0
        %v1022 = vsel %vm975, %v492, 0
        %vm1024 = vcmask 1041408
        %v1026 = vsel %vm1024, %v298, 0
        %1028 = vmatprep.subr.mxu0 0.0
        %1029 = vmatpush1.msra.mxu0 %v297
        %1030 = vmatprep.subr.mxu0 0.0
        %1031 = vmatpush1.msra.mxu0 %v1026
        %1032 = vmatprep.subr.mxu0 0.0
        %1033 = vmatpush1.msra.mxu0 0.0
        %1034 = vmatprep.subr.mxu0 0.0
        %1035 = vmatpush1.msra.mxu0 0.0
        %1036 = vmatprep.subr.mxu0 0.0
        %1037 = vmatpush1.msra.mxu0 0.0
        %1038 = vmatprep.subr.mxu0 0.0
        %1039 = vmatpush1.msra.mxu0 0.0
        %1040 = vmatprep.subr.mxu0 0.0
        %1041 = vmatpush1.msra.mxu0 0.0
        %1042 = vmatprep.subr.mxu0 0.0
        %1043 = vmatpush1.msra.mxu0 0.0
        %1044 = vmatprep.subr.mxu0 0.0
        %1045 = vmatpush1.msra.mxu0 0.0
        %1046 = vmatprep.subr.mxu0 0.0
        %1047 = vmatpush1.msra.mxu0 0.0
        %1048 = vmatprep.subr.mxu0 0.0
        %1049 = vmatpush1.msra.mxu0 0.0
        %1050 = vmatprep.subr.mxu0 0.0
        %1051 = vmatpush1.msra.mxu0 0.0
        %1052 = vmatprep.subr.mxu0 0.0
        %1053 = vmatpush1.msra.mxu0 0.0
        %1054 = vmatprep.subr.mxu0 0.0
        %1055 = vmatpush1.msra.mxu0 0.0
        %1056 = vmatprep.subr.mxu0 0.0
        %1057 = vmatpush1.msra.mxu0 0.0
        %1058 = vmatprep.subr.mxu0 0.0
        %1059 = vmatpush1.msra.mxu0 0.0
        %1060 = vmatprep.subr.mxu0 0.0
        %1061 = vmatpush1.msra.mxu0 0.0
        %1062 = vmatprep.subr.mxu0 0.0
        %1063 = vmatpush1.msra.mxu0 0.0
        %1064 = vmatprep.subr.mxu0 0.0
        %1065 = vmatpush1.msra.mxu0 0.0
        %1066 = vmatprep.subr.mxu0 0.0
        %1067 = vmatpush1.msra.mxu0 0.0
        %1068 = vmatprep.subr.mxu0 0.0
        %1069 = vmatpush1.msra.mxu0 0.0
        %1070 = vmatprep.subr.mxu0 0.0
        %1071 = vmatpush1.msra.mxu0 0.0
        %1072 = vmatprep.subr.mxu0 0.0
        %1073 = vmatpush1.msra.mxu0 0.0
        %1074 = vmatprep.subr.mxu0 0.0
        %1075 = vmatpush1.msra.mxu0 0.0
        %1076 = vmatprep.subr.mxu0 0.0
        %1077 = vmatpush1.msra.mxu0 0.0
        %1078 = vmatprep.subr.mxu0 0.0
        %1079 = vmatpush1.msra.mxu0 0.0
        %1080 = vmatprep.subr.mxu0 0.0
        %1081 = vmatpush1.msra.mxu0 0.0
        %1082 = vmatprep.subr.mxu0 0.0
        %1083 = vmatpush1.msra.mxu0 0.0
        %1084 = vmatprep.subr.mxu0 0.0
        %1085 = vmatpush1.msra.mxu0 0.0
        %1086 = vmatprep.subr.mxu0 0.0
        %1087 = vmatpush1.msra.mxu0 0.0
        %1088 = vmatprep.subr.mxu0 0.0
        %1089 = vmatpush1.msra.mxu0 0.0
        %1090 = vmatprep.subr.mxu0 0.0
        %1091 = vmatpush1.msra.mxu0 0.0
        %1092 = vmatprep.mubr.f32.mxu0 0.0
        %1093 = vmatmul.mubr.f32.gmra.mrb[0].mxu0 %v977
        %v1094 = vpop.f32.mrb[0].mxu0
        %v1095 = vadd.f32 %v913, %v1094
        %v1096 = vpop.f32.mrb[0].mxu0
        %1097 = vmatprep.mubr.f32.mxu0 0.0
        %1098 = vmatmul.mubr.f32.gmra.mrb[0].mxu0 %v980
        %v1099 = vpop.f32.mrb[0].mxu0
        %v1100 = vadd.f32 %v916, %v1099
        %v1101 = vpop.f32.mrb[0].mxu0
        %1102 = vmatprep.mubr.f32.mxu0 0.0
        %1103 = vmatmul.mubr.f32.gmra.mrb[0].mxu0 %v983
        %v1104 = vpop.f32.mrb[0].mxu0
        %v1105 = vadd.f32 %v921, %v1104
        %v1106 = vpop.f32.mrb[0].mxu0
        %1107 = vmatprep.mubr.f32.mxu0 0.0
        %1108 = vmatmul.mubr.f32.gmra.mrb[0].mxu0 %v986
        %v1109 = vpop.f32.mrb[0].mxu0
        %v1110 = vadd.f32 %v924, %v1109
        %v1111 = vpop.f32.mrb[0].mxu0
        %1112 = vmatprep.mubr.f32.mxu0 0.0
        %1113 = vmatmul.mubr.f32.gmra.mrb[0].mxu0 %v989
        %v1114 = vpop.f32.mrb[0].mxu0
        %v1115 = vadd.f32 %v929, %v1114
        %v1116 = vpop.f32.mrb[0].mxu0
        %1117 = vmatprep.mubr.f32.mxu0 0.0
        %1118 = vmatmul.mubr.f32.gmra.mrb[0].mxu0 %v992
        %v1119 = vpop.f32.mrb[0].mxu0
        %v1120 = vadd.f32 %v932, %v1119
        %v1121 = vpop.f32.mrb[0].mxu0
        %1122 = vmatprep.mubr.f32.mxu0 0.0
        %1123 = vmatmul.mubr.f32.gmra.mrb[0].mxu0 %v995
        %v1124 = vpop.f32.mrb[0].mxu0
        %v1125 = vadd.f32 %v937, %v1124
        %v1126 = vpop.f32.mrb[0].mxu0
        %1127 = vmatprep.mubr.f32.mxu0 0.0
        %1128 = vmatmul.mubr.f32.gmra.mrb[0].mxu0 %v998
        %v1129 = vpop.f32.mrb[0].mxu0
        %v1130 = vadd.f32 %v940, %v1129
        %v1131 = vpop.f32.mrb[0].mxu0
        %1132 = vmatprep.mubr.f32.mxu0 0.0
        %1133 = vmatmul.mubr.f32.gmra.mrb[0].mxu0 %v1001
        %v1134 = vpop.f32.mrb[0].mxu0
        %v1135 = vadd.f32 %v945, %v1134
        %v1136 = vpop.f32.mrb[0].mxu0
        %1137 = vmatprep.mubr.f32.mxu0 0.0
        %1138 = vmatmul.mubr.f32.gmra.mrb[0].mxu0 %v1004
        %v1139 = vpop.f32.mrb[0].mxu0
        %v1140 = vadd.f32 %v948, %v1139
        %v1141 = vpop.f32.mrb[0].mxu0
        %1142 = vmatprep.mubr.f32.mxu0 0.0
        %1143 = vmatmul.mubr.f32.gmra.mrb[0].mxu0 %v1007
        %v1144 = vpop.f32.mrb[0].mxu0
        %v1145 = vadd.f32 %v953, %v1144
        %v1146 = vpop.f32.mrb[0].mxu0
        %1147 = vmatprep.mubr.f32.mxu0 0.0
        %1148 = vmatmul.mubr.f32.gmra.mrb[0].mxu0 %v1010
        %v1149 = vpop.f32.mrb[0].mxu0
        %v1150 = vadd.f32 %v956, %v1149
        %v1151 = vpop.f32.mrb[0].mxu0
        %1152 = vmatprep.mubr.f32.mxu0 0.0
        %1153 = vmatmul.mubr.f32.gmra.mrb[0].mxu0 %v1013
        %v1154 = vpop.f32.mrb[0].mxu0
        %v1155 = vadd.f32 %v961, %v1154
        %v1156 = vpop.f32.mrb[0].mxu0
        %1157 = vmatprep.mubr.f32.mxu0 0.0
        %1158 = vmatmul.mubr.f32.gmra.mrb[0].mxu0 %v1016
        %v1159 = vpop.f32.mrb[0].mxu0
        %v1160 = vadd.f32 %v964, %v1159
        %v1161 = vpop.f32.mrb[0].mxu0
        %1162 = vmatprep.mubr.f32.mxu0 0.0
        %1163 = vmatmul.mubr.f32.gmra.mrb[0].mxu0 %v1019
        %v1164 = vpop.f32.mrb[0].mxu0
        %v1165 = vadd.f32 %v969, %v1164
        %v1166 = vpop.f32.mrb[0].mxu0
        %1167 = vmatprep.mubr.f32.mxu0 0.0
        %1168 = vmatmul.mubr.f32.gmra.mrb[0].mxu0 %v1022
        %v1169 = vpop.f32.mrb[0].mxu0
        %v1170 = vadd.f32 %v972, %v1169
        %v1171 = vpop.f32.mrb[0].mxu0
        %1172 = vdwg.mxu0
        %1173 = vst [vmem:[%s234] sm:$0xff] %v1095
        %1174 = vst [vmem:[%s234 + $0x8] sm:$0xff] %v1100
        %1175 = vst [vmem:[%s234 + $0x10] sm:$0xff] %v1105
        %1176 = vst [vmem:[%s234 + $0x18] sm:$0xff] %v1110
        %1177 = vst [vmem:[%s234 + $0x20] sm:$0xff] %v1115
        %1178 = vst [vmem:[%s234 + $0x28] sm:$0xff] %v1120
        %1179 = vst [vmem:[%s234 + $0x30] sm:$0xff] %v1125
        %1180 = vst [vmem:[%s234 + $0x38] sm:$0xff] %v1130
        %1181 = vst [vmem:[%s234 + $0x40] sm:$0xff] %v1135
        %1182 = vst [vmem:[%s234 + $0x48] sm:$0xff] %v1140
        %1183 = vst [vmem:[%s234 + $0x50] sm:$0xff] %v1145
        %1184 = vst [vmem:[%s234 + $0x58] sm:$0xff] %v1150
        %1185 = vst [vmem:[%s234 + $0x60] sm:$0xff] %v1155
        %1186 = vst [vmem:[%s234 + $0x68] sm:$0xff] %v1160
        %1187 = vst [vmem:[%s234 + $0x70] sm:$0xff] %v1165
        %1188 = vst [vmem:[%s234 + $0x78] sm:$0xff] %v1170
        %s1189 = sand.u32 %s142, 1
        %s1190 = scalar_lea.sflag [#allocation3], %s1189
        %s1191 = sand.u32 %s142, 1
        %s1192 = smul.addr %s1191, 128
        %s1193 = scalar_lea.vmem [#allocation2], %s1192
        // Predicated region
        $region41: #{tpu_custom_call.1} parent=39 // pred_check
          %p1194 = pneg %p152
        $region42: #{tpu_custom_call.1} parent=39 // pred_check_branch
          %1196 = sbr.rel (%p1194) target = $region44
        $region43: #{tpu_custom_call.1} parent=39 // pred_region
          %s1197 = smul.u32 16, %s19
          %s1199 = ssub.s32 2048, 2048
          %1200 = vsyncadd %s1190, %s1199
          %s1201 = smul.addr %s1197, 128
          %s1202 = scalar_lea.hbm %s5, %s1201
          %s1203 = sshll.u32 %s1193, 4
          %s1204 = int_to_ptr.vmem [resolvable:$true] %s1203
          %1209 = dma.vmem_to_hbm [thread:$0]  %s1204, 2048, %s1202, %s1190, 128, 128, 8
        $region44: #{tpu_custom_call.1} parent=39 // pred_fallthru
          _
      $region40: #{tpu_custom_call.1} parent=5 // pred_fallthru
        _
      %p1210 = scmp.le.s32.totalorder 2, %s14
      // Predicated region
      $region45: #{tpu_custom_call.1} parent=5 // pred_check
        %p1211 = pneg %p1210
      $region46: #{tpu_custom_call.1} parent=5 // pred_check_branch
        %1213 = sbr.rel (%p1211) target = $region48
      $region47: #{tpu_custom_call.1} parent=5 // pred_region
        %s1214 = ssub.s32 %s14, 2
        // Predicated region
        $region49: #{tpu_custom_call.1} parent=47 // pred_check
          %p1215 = pneg %p158
        $region50: #{tpu_custom_call.1} parent=47 // pred_check_branch
          %1217 = sbr.rel (%p1215) target = $region52
        $region51: #{tpu_custom_call.1} parent=47 // pred_region
          %s1218 = sand.u32 %s143, 1
          %s1219 = scalar_lea.sflag [#allocation3], %s1218
          %s1220 = sand.u32 %s143, 1
          %s1221 = smul.addr %s1220, 128
          %s1222 = scalar_lea.vmem [#allocation2], %s1221
          %1223 = dma.done %s1219, 2048
        $region52: #{tpu_custom_call.1} parent=47 // pred_fallthru
          _
      $region48: #{tpu_custom_call.1} parent=5 // pred_fallthru
        _
    $region6: #{tpu_custom_call.1} parent=1 // loop_footer
      %s18 = sadd.s32 1, %s14
    $region7: #{tpu_custom_call.1} parent=1 // loop_footer_branch
      %13 = sbr.rel target = $region3
    $region8: #{tpu_custom_call.1} parent=1 // loop_exit
      _
    %1224 = vsyncpa [#allocation3], 1
    %s1225 = scalar_lea.sflag [#allocation3], 1
    %1226 = vsyncpa %s1225, 1

</llo_original>
